<compile_context>
chip_gen: v6e
topology: v6e:2x2x1
jax: 0.10.0
libtpu: 0.0.40
codegen_flags: <defaults>
</compile_context>

<pallas_src>
import functools
import math

import jax
import jax.numpy as jnp
import numpy as np
from jax import lax
from jax.experimental import pallas as pl
from jax.experimental.pallas import tpu as pltpu

_LANE = 128
_SUBLANE = 8


def _ceil_to(a: int, m: int) -> int:
    return -(-a // m) * m


def _pick_vmem_limit_bytes() -> int:
    """Per-generation scoped-VMEM budget for the Mosaic compiler."""
    kind = ""
    try:
        kind = jax.devices()[0].device_kind.lower()
    except Exception:
        pass
    if "v5" in kind or "v6" in kind:
        return 100 * 1024 * 1024      # 128 MiB physical VMEM per TensorCore
    if "v7" in kind or "7x" in kind:
        return 48 * 1024 * 1024       # 64 MiB physical VMEM per TensorCore
    return 32 * 1024 * 1024           # unknown chip: conservative


def _classifier_kernel(xp_ref, w1_ref, w2_ref, o_ref, *,
                       groups_per_tile, prows_per_group):
    # xp_ref: [TLp, P*D]  packed x tile (P consecutive original rows per packed row)
    # w1_ref: [P*D, P*E]  block-diagonal kron(I_P, W1.T), bf16, VMEM-resident
    # w2_ref: [P*E, Cp]   vstack_P(W2.T / J), class dim zero-padded to Cp, bf16, resident
    # o_ref : [TG, Cp]    f32 logits tile, TG = groups_per_tile
    xp = xp_ref[...]
    if xp.dtype != jnp.bfloat16:               # trace-time branch; no-op for bf16 x
        xp = xp.astype(jnp.bfloat16)

    # local[p, j*E+e] = relu(x[p*P+j] . W1[e])   (MXU, K = P*D, f32 accumulation)
    local = lax.dot_general(
        xp, w1_ref[...],
        dimension_numbers=(((1,), (0,)), ((), ())),
        preferred_element_type=jnp.float32,
    )
    local = jnp.maximum(local, 0.0)

    # Sublane sum over the J/P packed rows of each group (XLU slot, ~free).
    # The lane-group reduce and the 1/J mean scale are folded into w2_ref.
    pe = local.shape[-1]
    gsum = jnp.sum(local.reshape(groups_per_tile, prows_per_group, pe), axis=1)

    # logits = (1/J) * sum_{rows in group} local . W2.T   (MXU, f32 acc, lane-dense store)
    o_ref[...] = lax.dot_general(
        gsum.astype(jnp.bfloat16), w2_ref[...],
        dimension_numbers=(((1,), (0,)), ((), ())),
        preferred_element_type=jnp.float32,
    ).astype(o_ref.dtype)


def classifier_forward(x, W1, W2, J, row_tile=32768):
    """Classifier.forward: x [L, D] (f32 or bf16), W1 [E, D], W2 [C, E] -> logits [L//J, C] f32.

    `row_tile` caps the number of original x rows per grid step; the actual tile is
    additionally bounded by a per-generation VMEM budget (lane-padded accounting).
    """
    L, D = x.shape
    E, D2 = W1.shape
    C, E2 = W2.shape
    assert D == D2 and E == E2, "weight shapes inconsistent with x"
    assert L % J == 0, "number of rows must be a multiple of J"
    G = L // J

    # ---- lane packing factor: P original rows per 128-lane packed row ---------
    P = _LANE // D if (D <= _LANE and _LANE % D == 0) else 1
    P = max(1, math.gcd(P, J))        # groups must consist of whole packed rows
    PD, PE = P * D, P * E
    prows_per_group = J // P

    # ---- one-time (frozen-weight) operand preparation -------------------------
    Cp = _ceil_to(C, _LANE)                                    # lane-dense output
    w1_bd = jnp.kron(jnp.eye(P, dtype=jnp.bfloat16),
                     W1.T.astype(jnp.bfloat16))                # [P*D, P*E]
    w2_scaled = W2.astype(jnp.float32).T / float(J)            # fold 1/J into W2
    w2_pad = jnp.zeros((E, Cp), jnp.float32).at[:, :C].set(w2_scaled)
    w2_stack = jnp.tile(w2_pad, (P, 1)).astype(jnp.bfloat16)   # [P*E, Cp]

    # ---- tile choice: budget from lane-padded VMEM footprint ------------------
    vmem_limit = _pick_vmem_limit_bytes()
    x_item = jnp.dtype(x.dtype).itemsize
    lanes_x = _ceil_to(PD, _LANE)     # VMEM lays the last dim out 128-lane padded
    lanes_l = _ceil_to(PE, _LANE)
    # per packed row: x double-buffer + in-kernel bf16 copy + f32 `local`
    bytes_per_prow = lanes_x * (2 * x_item + 2) + lanes_l * 4
    budget = int(0.65 * vmem_limit)   # headroom: weights, out buffers, Mosaic internals
    gt_vmem = max(1, budget // (bytes_per_prow * prows_per_group))
    gt_user = max(1, row_tile // J)
    gt = max(_SUBLANE, (min(gt_vmem, gt_user) // _SUBLANE) * _SUBLANE)
    # guarantee >= 2 grid steps whenever there is enough work (v7x megacore)
    half = _ceil_to(max(1, (G + 1) // 2), _SUBLANE)
    gt = min(gt, max(_SUBLANE, half))
    G_pad = _ceil_to(G, gt)
    n_tiles = G_pad // gt

    # ---- pad x by whole groups (zero rows -> zero logits, sliced off) ---------
    L_pad = G_pad * J
    if L_pad != L:
        x = jnp.concatenate([x, jnp.zeros((L_pad - L, D), x.dtype)], axis=0)
    xp = x.reshape(L_pad // P, PD)    # free row-major view; all 128 lanes used
    TLp = gt * prows_per_group        # packed rows per grid step

    kernel = functools.partial(_classifier_kernel,
                               groups_per_tile=gt,
                               prows_per_group=prows_per_group)

    out_padded = pl.pallas_call(
        kernel,
        out_shape=jax.ShapeDtypeStruct((G_pad, Cp), jnp.float32),
        grid=(n_tiles,),
        in_specs=[
            pl.BlockSpec((TLp, PD), lambda i: (i, 0)),   # stream packed x row tiles
            pl.BlockSpec((PD, PE), lambda i: (0, 0)),    # W1' resident across grid
            pl.BlockSpec((PE, Cp), lambda i: (0, 0)),    # W2' (scaled/stacked) resident
        ],
        out_specs=pl.BlockSpec((gt, Cp), lambda i: (i, 0)),
        compiler_params=pltpu.CompilerParams(
            dimension_semantics=("parallel",),           # row tiles -> both v7x TCs
            vmem_limit_bytes=vmem_limit,
        ),
    )(xp, w1_bd, w2_stack)

    return out_padded[:G, :C]


if __name__ == "__main__":
    # Small, shape-consistent config:
    #   L = 256 input windows, D = 32 raw feature dim, E = 32 encoding_dim,
    #   C = 4 class_count, J = 8  ->  G = 32 pooled feature rows.
    L, D, E, C, J = 256, 32, 32, 4, 8

    key = jax.random.PRNGKey(0)
    kx, kw1, kw2 = jax.random.split(key, 3)
    x = jax.random.normal(kx, (L, D), dtype=jnp.float32)
    W1 = jax.random.normal(kw1, (E, D), dtype=jnp.float32) * 0.1   # frozen encoder weights
    W2 = jax.random.normal(kw2, (C, E), dtype=jnp.float32) * 0.1   # classifier (bias=False)

    def ref_f32(xr):
        local = jnp.maximum(xr @ W1.T, 0.0)
        feats = local.reshape(xr.shape[0] // J, J, E).mean(axis=1)
        return feats @ W2.T

    # row_tile=64 -> 8 groups (64 rows) per grid step, grid=(4,): exercises the
    # pipelined multi-step, megacore-shardable path at this small size.
    logits = jax.block_until_ready(classifier_forward(x, W1, W2, J, row_tile=64))
    assert logits.shape == (L // J, C)
    np.testing.assert_allclose(np.asarray(logits), np.asarray(ref_f32(x)),
                               rtol=3e-2, atol=3e-2)

    # bf16-input path (producer already emits bf16): consumed directly by the same
    # kernel, no extra wrapper cast pass, half the dominant HBM read.
    logits_bf16 = jax.block_until_ready(
        classifier_forward(x.astype(jnp.bfloat16), W1, W2, J, row_tile=64))
    np.testing.assert_allclose(np.asarray(logits_bf16), np.asarray(ref_f32(x)),
                               rtol=5e-2, atol=5e-2)

    # Group count that does not divide the tile (29 groups): exercises the
    # whole-group zero-padding path instead of collapsing to one giant block.
    L2 = 29 * J
    x2 = x[:L2]
    logits2 = jax.block_until_ready(classifier_forward(x2, W1, W2, J, row_tile=64))
    assert logits2.shape == (29, C)
    np.testing.assert_allclose(np.asarray(logits2), np.asarray(ref_f32(x2)),
                               rtol=3e-2, atol=3e-2)

    print("KERNEL_OK")
</pallas_src>

<mosaic_0001>
module attributes {stable_mosaic.version = 11 : i64} {
  func.func @_classifier_kernel(%arg0: i32, %arg1: memref<16x128xf32, #tpu.memory_space<vmem>>, %arg2: memref<128x128xbf16, #tpu.memory_space<vmem>>, %arg3: memref<128x128xbf16, #tpu.memory_space<vmem>>, %arg4: memref<8x128xf32, #tpu.memory_space<vmem>>) attributes {dimension_semantics = [#tpu.dimension_semantics<parallel>], iteration_bounds = array<i64: 4>, scalar_prefetch = 0 : i64, scratch_operands = 0 : i64, tpu.core_type = #tpu.core_type<tc>, window_params = [{transform_indices = @transform_0, window_bounds = array<i64: 16, 128>}, {pipeline_mode = #tpu.pipeline_mode<synchronous>, transform_indices = @transform_1, window_bounds = array<i64: 128, 128>}, {pipeline_mode = #tpu.pipeline_mode<synchronous>, transform_indices = @transform_2, window_bounds = array<i64: 128, 128>}, {transform_indices = @transform_3, window_bounds = array<i64: 8, 128>}]} {
    %c0 = arith.constant 0 : index
    %c0_0 = arith.constant 0 : index
    %0 = vector.load %arg1[%c0, %c0_0] : memref<16x128xf32, #tpu.memory_space<vmem>>, vector<16x128xf32>
    %1 = arith.truncf %0 : vector<16x128xf32> to vector<16x128xbf16>
    %c0_1 = arith.constant 0 : index
    %c0_2 = arith.constant 0 : index
    %2 = vector.load %arg2[%c0_1, %c0_2] : memref<128x128xbf16, #tpu.memory_space<vmem>>, vector<128x128xbf16>
    %cst = arith.constant dense<0.000000e+00> : vector<16x128xf32>
    %3 = tpu.matmul %1, %2, %cst {dimension_numbers = #tpu.dot_dimension_numbers<[1], [0], [0], [1], [0, 0, 1, 1], [], []>} : vector<16x128xbf16>, vector<128x128xbf16>, vector<16x128xf32> -> vector<16x128xf32>
    %cst_3 = arith.constant 0.000000e+00 : f32
    %4 = vector.broadcast %cst_3 : f32 to vector<16x128xf32>
    %5 = arith.maximumf %3, %4 : vector<16x128xf32>
    %6 = vector.shape_cast %5 : vector<16x128xf32> to vector<8x2x128xf32>
    %cst_4 = arith.constant dense<0.000000e+00> : vector<8x128xf32>
    %7 = vector.multi_reduction <add>, %6, %cst_4 [1] : vector<8x2x128xf32> to vector<8x128xf32>
    %8 = arith.truncf %7 : vector<8x128xf32> to vector<8x128xbf16>
    %c0_5 = arith.constant 0 : index
    %c0_6 = arith.constant 0 : index
    %9 = vector.load %arg3[%c0_5, %c0_6] : memref<128x128xbf16, #tpu.memory_space<vmem>>, vector<128x128xbf16>
    %cst_7 = arith.constant dense<0.000000e+00> : vector<8x128xf32>
    %10 = tpu.matmul %8, %9, %cst_7 {dimension_numbers = #tpu.dot_dimension_numbers<[1], [0], [0], [1], [0, 0, 1, 1], [], []>} : vector<8x128xbf16>, vector<128x128xbf16>, vector<8x128xf32> -> vector<8x128xf32>
    %c0_8 = arith.constant 0 : index
    %c0_9 = arith.constant 0 : index
    %11 = vector.load %arg4[%c0_8, %c0_9] : memref<8x128xf32, #tpu.memory_space<vmem>>, vector<8x128xf32>
    tpu.vector_store %arg4[%c0_8, %c0_9], %10 {strides = array<i32>} : memref<8x128xf32, #tpu.memory_space<vmem>>, vector<8x128xf32>,
    return
  }
  func.func @transform_0(%arg0: i32) -> (i32, i32) {
    %c0_i32 = arith.constant 0 : i32
    %c0_i32_0 = arith.constant 0 : i32
    return %arg0, %c0_i32 : i32, i32
  }
  func.func @transform_1(%arg0: i32) -> (i32, i32) {
    %c0_i32 = arith.constant 0 : i32
    %c0_i32_0 = arith.constant 0 : i32
    %c0_i32_1 = arith.constant 0 : i32
    return %c0_i32, %c0_i32_0 : i32, i32
  }
  func.func @transform_2(%arg0: i32) -> (i32, i32) {
    %c0_i32 = arith.constant 0 : i32
    %c0_i32_0 = arith.constant 0 : i32
    %c0_i32_1 = arith.constant 0 : i32
    return %c0_i32, %c0_i32_0 : i32, i32
  }
  func.func @transform_3(%arg0: i32) -> (i32, i32) {
    %c0_i32 = arith.constant 0 : i32
    %c0_i32_0 = arith.constant 0 : i32
    return %arg0, %c0_i32 : i32, i32
  }
}

</mosaic_0001>

<llo_original>
// kernel: tpu_custom_call.1
$region0: #{tpu_custom_call.1}
  #allocation0 [shape = 'u32[]', space=smem, size = 0x4, offset = 0x4, fixed_abs, tag = 'smem constant byte address 0x4 - core index']
  #allocation1 [shape = 'u32[144,128]{1,0:T(1,128)}', space=vmem, size = 0x12000, scoped, tag = 'internal scratch']
  %s0 = inlined_call_operand.hbm [shape: f32[64,128], index: 0, kind: input, shape index: {}]
  %s1 = inlined_call_operand.hbm [shape: bf16[128,128], index: 1, kind: input, shape index: {}]
  %s2 = inlined_call_operand.hbm [shape: bf16[128,128], index: 2, kind: input, shape index: {}]
  %s3 = inlined_call_operand.hbm [shape: f32[32,128], index: 3, kind: output, shape index: {}]
  %s4 = sld [smem:[#allocation0]]
  $region57: #{tpu_custom_call.1} parent=0
    _
  %s6 = ssub.s32 1, %s4
  %s7 = scalar_select 0, %s6, %s4
  $region1: #{tpu_custom_call.1} parent=0
    #allocation2 [shape = 'u8[16384]{0}', space=vmem, size = 0x4000, scoped, tag = 'input window, operand 0']
    #allocation3 [shape = 's32[2]{0}', space=sflag, size = 0x8, scoped, tag = 'scoped memory for tpu_custom_call.1']
    #allocation4 [shape = 's32[2]{0}', space=sflag, size = 0x8, scoped, tag = 'scoped memory for tpu_custom_call.1']
    #allocation5 [shape = 'u8[32768]{0}', space=vmem, size = 0x8000, scoped, tag = 'input window, operand 1, single buffered']
    #allocation6 [shape = 's32[1]{0}', space=sflag, size = 0x4, scoped, tag = 'scoped memory for tpu_custom_call.1']
    #allocation7 [shape = 'u8[32768]{0}', space=vmem, size = 0x8000, scoped, tag = 'input window, operand 2, single buffered']
    #allocation8 [shape = 'u8[8192]{0}', space=vmem, size = 0x2000, scoped, tag = 'output window, operand 0']
    %8 = vsyncpa [#allocation3], 0
    %s9 = scalar_lea.sflag [#allocation3], 1
    %10 = vsyncpa %s9, 0
    %11 = vsyncpa [#allocation6], 0
    %12 = vsyncpa [#allocation4], 0
    %s13 = scalar_lea.sflag [#allocation4], 1
    %14 = vsyncpa %s13, 0
    loop: start=0, step=1, limit=6
    $region2: #{tpu_custom_call.1} parent=1 // loop_pre_header
      _
    $region3: #{tpu_custom_call.1} parent=1 // loop_header
      %s16 = sphi 0, %s20
      %p17 = scmp.ge.s32.totalorder %s16, 6
      %s26 = sphi 0, %s28
      %s29 = sphi 0, %s26
      %s30 = sphi 0, %s29
      %s46 = sphi 0, %s30
      %s50 = sphi 0, %s50
      %s52 = sphi 0, %s50
      %s53 = sphi 0, %s52
      %s67 = sphi 0, %s53
      %s71 = sphi 0, %s71
      %s73 = sphi 0, %s71
      %s74 = sphi 0, %s73
      %s88 = sphi 0, %s74
      %s94 = sphi 0, %s96
      %s97 = sphi 0, %s94
      %s98 = sphi 0, %s97
      %s114 = sphi 0, %s98
    $region4: #{tpu_custom_call.1} parent=1 // loop_header_branch
      %19 = sbr.rel (%p17) target = $region8
    $region5: #{tpu_custom_call.1} parent=1 // loop_body
      %s21 = ssub.s32 %s16, 1
      %s22 = ssub.s32 %s16, 2
      %s23 = sadd.s32 %s16, 1
      %s24 = ssub.s32 %s16, %s23
      %p25 = scmp.eq.s32.totalorder %s24, 0
      %s27 = sadd.s32 %s26, 1
      %s28 = scalar_select %p25, %s26, %s27
      %p31 = pneg %p25
      %p32 = scmp.eq.s32.totalorder %s16, 3
      %p33 = por %p31, %p32
      %p34 = scmp.ne.s32.totalorder %s26, %s29
      %p35 = scmp.eq.s32.totalorder %s16, 0
      %p36 = por %p34, %p35
      %p37 = scmp.ne.s32.totalorder %s26, %s29
      %p38 = scmp.eq.s32.totalorder %s21, 3
      %p39 = por %p37, %p38
      %p40 = scmp.ne.s32.totalorder %s29, %s30
      %p41 = scmp.eq.s32.totalorder %s21, 0
      %p42 = por %p40, %p41
      %p43 = scmp.ne.s32.totalorder %s29, %s30
      %p44 = scmp.eq.s32.totalorder %s22, 3
      %p45 = por %p43, %p44
      %p47 = scmp.ne.s32.totalorder %s30, %s46
      %p48 = scmp.eq.s32.totalorder %s22, 0
      %p49 = por %p47, %p48
      %s51 = sadd.s32 %s50, 1
      %p54 = scmp.eq.s32.totalorder %s16, 3
      %p55 = scmp.ne.s32.totalorder %s50, %s52
      %p56 = scmp.eq.s32.totalorder %s16, 0
      %p57 = por %p55, %p56
      %p58 = scmp.ne.s32.totalorder %s50, %s52
      %p59 = scmp.eq.s32.totalorder %s21, 3
      %p60 = por %p58, %p59
      %p61 = scmp.ne.s32.totalorder %s52, %s53
      %p62 = scmp.eq.s32.totalorder %s21, 0
      %p63 = por %p61, %p62
      %p64 = scmp.ne.s32.totalorder %s52, %s53
      %p65 = scmp.eq.s32.totalorder %s22, 3
      %p66 = por %p64, %p65
      %p68 = scmp.ne.s32.totalorder %s53, %s67
      %p69 = scmp.eq.s32.totalorder %s22, 0
      %p70 = por %p68, %p69
      %s72 = sadd.s32 %s71, 1
      %p75 = scmp.eq.s32.totalorder %s16, 3
      %p76 = scmp.ne.s32.totalorder %s71, %s73
      %p77 = scmp.eq.s32.totalorder %s16, 0
      %p78 = por %p76, %p77
      %p79 = scmp.ne.s32.totalorder %s71, %s73
      %p80 = scmp.eq.s32.totalorder %s21, 3
      %p81 = por %p79, %p80
      %p82 = scmp.ne.s32.totalorder %s73, %s74
      %p83 = scmp.eq.s32.totalorder %s21, 0
      %p84 = por %p82, %p83
      %p85 = scmp.ne.s32.totalorder %s73, %s74
      %p86 = scmp.eq.s32.totalorder %s22, 3
      %p87 = por %p85, %p86
      %p89 = scmp.ne.s32.totalorder %s74, %s88
      %p90 = scmp.eq.s32.totalorder %s22, 0
      %p91 = por %p89, %p90
      %s92 = ssub.s32 %s16, %s23
      %p93 = scmp.eq.s32.totalorder %s92, 0
      %s95 = sadd.s32 %s94, 1
      %s96 = scalar_select %p93, %s94, %s95
      %p99 = pneg %p93
      %p100 = scmp.eq.s32.totalorder %s16, 3
      %p101 = por %p99, %p100
      %p102 = scmp.ne.s32.totalorder %s94, %s97
      %p103 = scmp.eq.s32.totalorder %s16, 0
      %p104 = por %p102, %p103
      %p105 = scmp.ne.s32.totalorder %s94, %s97
      %p106 = scmp.eq.s32.totalorder %s21, 3
      %p107 = por %p105, %p106
      %p108 = scmp.ne.s32.totalorder %s97, %s98
      %p109 = scmp.eq.s32.totalorder %s21, 0
      %p110 = por %p108, %p109
      %p111 = scmp.ne.s32.totalorder %s97, %s98
      %p112 = scmp.eq.s32.totalorder %s22, 3
      %p113 = por %p111, %p112
      %p115 = scmp.ne.s32.totalorder %s98, %s114
      %p116 = scmp.eq.s32.totalorder %s22, 0
      %p117 = por %p115, %p116
      %p118 = scmp.le.s32.totalorder 1, %s16
      %p119 = scmp.lt.s32.totalorder %s16, 5
      %p120 = pnand %p118, %p119
      %p121 = pneg %p120
      // Predicated region
      $region9: #{tpu_custom_call.1} parent=5 // pred_check
        _
      $region10: #{tpu_custom_call.1} parent=5 // pred_check_branch
        %123 = sbr.rel (%p120) target = $region12
      $region11: #{tpu_custom_call.1} parent=5 // pred_region
        %s124 = ssub.s32 %s16, 1
        // Predicated region
        $region13: #{tpu_custom_call.1} parent=11 // pred_check
          %p125 = pneg %p63
        $region14: #{tpu_custom_call.1} parent=11 // pred_check_branch
          %127 = sbr.rel (%p125) target = $region16
        $region15: #{tpu_custom_call.1} parent=11 // pred_region
          %s129 = ssub.s32 1024, 1024
          %130 = vsyncadd [#allocation6], %s129
          %s131 = sshll.u32 [#allocation5], 4
          %s132 = int_to_ptr.vmem [resolvable:$true] %s131
          %137 = dma.hbm_to_vmem [thread:$0]  %s1, 1024, %s132, [#allocation6], 64, 64, 4
        $region16: #{tpu_custom_call.1} parent=11 // pred_fallthru
          _
        // Predicated region
        $region17: #{tpu_custom_call.1} parent=11 // pred_check
          %p138 = pneg %p84
        $region18: #{tpu_custom_call.1} parent=11 // pred_check_branch
          %140 = sbr.rel (%p138) target = $region20
        $region19: #{tpu_custom_call.1} parent=11 // pred_region
          %s142 = ssub.s32 1024, 1024
          %143 = vsyncadd [#allocation6], %s142
          %s144 = sshll.u32 [#allocation7], 4
          %s145 = int_to_ptr.vmem [resolvable:$true] %s144
          %150 = dma.hbm_to_vmem [thread:$0]  %s2, 1024, %s145, [#allocation6], 64, 64, 4
        $region20: #{tpu_custom_call.1} parent=11 // pred_fallthru
          _
      $region12: #{tpu_custom_call.1} parent=5 // pred_fallthru
        _
      %p151 = scmp.lt.s32.totalorder %s16, 4
      // Predicated region
      $region21: #{tpu_custom_call.1} parent=5 // pred_check
        %p152 = pneg %p151
      $region22: #{tpu_custom_call.1} parent=5 // pred_check_branch
        %154 = sbr.rel (%p152) target = $region24
      $region23: #{tpu_custom_call.1} parent=5 // pred_region
        // Predicated region
        $region25: #{tpu_custom_call.1} parent=23 // pred_check
          %p155 = pneg %p36
        $region26: #{tpu_custom_call.1} parent=23 // pred_check_branch
          %157 = sbr.rel (%p155) target = $region28
        $region27: #{tpu_custom_call.1} parent=23 // pred_region
          %s158 = sand.u32 %s26, 1
          %s159 = scalar_lea.sflag [#allocation3], %s158
          %s160 = sand.u32 %s26, 1
          %s161 = smul.addr %s160, 16
          %s162 = scalar_lea.vmem [#allocation2], %s161
          %s163 = smul.u32 2, %s16
          %s165 = ssub.s32 256, 256
          %166 = vsyncadd %s159, %s165
          %s167 = smul.addr %s163, 128
          %s168 = scalar_lea.hbm %s0, %s167
          %s169 = sshll.u32 %s162, 4
          %s170 = int_to_ptr.vmem [resolvable:$true] %s169
          %175 = dma.hbm_to_vmem [thread:$0]  %s168, 256, %s170, %s159, 128, 128, 8
        $region28: #{tpu_custom_call.1} parent=23 // pred_fallthru
          _
      $region24: #{tpu_custom_call.1} parent=5 // pred_fallthru
        _
      %p176 = scmp.le.s32.totalorder 1, %s16
      %p177 = scmp.lt.s32.totalorder %s16, 5
      %p178 = pnand %p176, %p177
      %p179 = pneg %p178
      // Predicated region
      $region29: #{tpu_custom_call.1} parent=5 // pred_check
        _
      $region30: #{tpu_custom_call.1} parent=5 // pred_check_branch
        %181 = sbr.rel (%p178) target = $region32
      $region31: #{tpu_custom_call.1} parent=5 // pred_region
        %s182 = ssub.s32 %s16, 1
        %s183 = sand.u32 %s29, 1
        %s184 = scalar_lea.sflag [#allocation3], %s183
        %s185 = sand.u32 %s29, 1
        %s186 = smul.addr %s185, 16
        %s187 = scalar_lea.vmem [#allocation2], %s186
        // Predicated region
        $region33: #{tpu_custom_call.1} parent=31 // pred_check
          %p188 = pneg %p42
        $region34: #{tpu_custom_call.1} parent=31 // pred_check_branch
          %190 = sbr.rel (%p188) target = $region36
        $region35: #{tpu_custom_call.1} parent=31 // pred_region
          %191 = dma.done %s184, 256
        $region36: #{tpu_custom_call.1} parent=31 // pred_fallthru
          _
        // Predicated region
        $region37: #{tpu_custom_call.1} parent=31 // pred_check
          %p192 = pneg %p63
        $region38: #{tpu_custom_call.1} parent=31 // pred_check_branch
          %194 = sbr.rel (%p192) target = $region40
        $region39: #{tpu_custom_call.1} parent=31 // pred_region
          %195 = dma.done [#allocation6], 1024
        $region40: #{tpu_custom_call.1} parent=31 // pred_fallthru
          _
        // Predicated region
        $region41: #{tpu_custom_call.1} parent=31 // pred_check
          %p196 = pneg %p84
        $region42: #{tpu_custom_call.1} parent=31 // pred_check_branch
          %198 = sbr.rel (%p196) target = $region44
        $region43: #{tpu_custom_call.1} parent=31 // pred_region
          %199 = dma.done [#allocation6], 1024
        $region44: #{tpu_custom_call.1} parent=31 // pred_fallthru
          _
        %s200 = sand.u32 %s29, 1
        %s201 = scalar_lea.sflag [#allocation3], %s200
        %s202 = sand.u32 %s29, 1
        %s203 = smul.addr %s202, 16
        %s204 = scalar_lea.vmem [#allocation2], %s203
        %p205 = pneg %p42
        %p206 = pneg %p39
        %p207 = pneg %p63
        %p208 = pneg %p60
        %p209 = pneg %p84
        %p210 = pneg %p81
        %p211 = pneg %p110
        %p212 = pneg %p107
        %s213 = sand.u32 %s97, 1
        %s214 = scalar_lea.sflag [#allocation4], %s213
        %s215 = sand.u32 %s97, 1
        %s216 = smul.addr %s215, 8
        %s217 = scalar_lea.vmem [#allocation8], %s216
        %s218 = smul.u32 2, %s21
        %v220 = vld [vmem:[%s187] sm:$0xff]
        %v221 = vld [vmem:[%s187 + $0x8] sm:$0xff]
        %v222 = vpack.c.bf16 %v221, %v220
        %v223 = vld [vmem:[#allocation5] sm:$0xf]
        %v224 = vld [vmem:[#allocation5 + $0x4] sm:$0xf]
        %v225 = vld [vmem:[#allocation5 + $0x8] sm:$0xf]
        %v226 = vld [vmem:[#allocation5 + $0xc] sm:$0xf]
        %v227 = vld [vmem:[#allocation5 + $0x10] sm:$0xf]
        %v228 = vld [vmem:[#allocation5 + $0x14] sm:$0xf]
        %v229 = vld [vmem:[#allocation5 + $0x18] sm:$0xf]
        %v230 = vld [vmem:[#allocation5 + $0x1c] sm:$0xf]
        %v231 = vld [vmem:[#allocation5 + $0x20] sm:$0xf]
        %v232 = vld [vmem:[#allocation5 + $0x24] sm:$0xf]
        %v233 = vld [vmem:[#allocation5 + $0x28] sm:$0xf]
        %v234 = vld [vmem:[#allocation5 + $0x2c] sm:$0xf]
        %v235 = vld [vmem:[#allocation5 + $0x30] sm:$0xf]
        %v236 = vld [vmem:[#allocation5 + $0x34] sm:$0xf]
        %v237 = vld [vmem:[#allocation5 + $0x38] sm:$0xf]
        %v238 = vld [vmem:[#allocation5 + $0x3c] sm:$0xf]
        %v255 = vunpack.c.l.b16 %v223
        %v256 = vunpack.c.l.b16 %v224
        %v257 = vunpack.c.l.b16 %v225
        %v258 = vunpack.c.l.b16 %v226
        %v259 = vunpack.c.l.b16 %v227
        %v260 = vunpack.c.l.b16 %v228
        %v261 = vunpack.c.l.b16 %v229
        %v262 = vunpack.c.l.b16 %v230
        %v263 = vunpack.c.l.b16 %v231
        %v264 = vunpack.c.l.b16 %v232
        %v265 = vunpack.c.l.b16 %v233
        %v266 = vunpack.c.l.b16 %v234
        %v267 = vunpack.c.l.b16 %v235
        %v268 = vunpack.c.l.b16 %v236
        %v269 = vunpack.c.l.b16 %v237
        %v270 = vunpack.c.l.b16 %v238
        %v271 = vpack.c.b16 %v256, %v255
        %v272 = vpack.c.b16 %v258, %v257
        %v273 = vpack.c.b16 %v260, %v259
        %v274 = vpack.c.b16 %v262, %v261
        %v275 = vpack.c.b16 %v264, %v263
        %v276 = vpack.c.b16 %v266, %v265
        %v277 = vpack.c.b16 %v268, %v267
        %v278 = vpack.c.b16 %v270, %v269
        %287 = vmatprep.subr.bf16.mxu0 0
        %288 = vmatpush1.bf16.msra.mxu0 %v278
        %289 = vmatprep.subr.bf16.mxu0 0
        %290 = vmatpush1.bf16.msra.mxu0 %v277
        %291 = vmatprep.subr.bf16.mxu0 0
        %292 = vmatpush1.bf16.msra.mxu0 %v276
        %293 = vmatprep.subr.bf16.mxu0 0
        %294 = vmatpush1.bf16.msra.mxu0 %v275
        %295 = vmatprep.subr.bf16.mxu0 0
        %296 = vmatpush1.bf16.msra.mxu0 %v274
        %297 = vmatprep.subr.bf16.mxu0 0
        %298 = vmatpush1.bf16.msra.mxu0 %v273
        %299 = vmatprep.subr.bf16.mxu0 0
        %300 = vmatpush1.bf16.msra.mxu0 %v272
        %301 = vmatprep.subr.bf16.mxu0 0
        %302 = vmatpush1.bf16.msra.mxu0 %v271
        %303 = vmatprep.subr.bf16.mxu0 0
        %304 = vmatpush2.bf16.msra.mxu0 0
        %305 = vmatprep.subr.bf16.mxu0 0
        %306 = vmatpush2.bf16.msra.mxu0 0
        %307 = vmatprep.subr.bf16.mxu0 0
        %308 = vmatpush2.bf16.msra.mxu0 0
        %309 = vmatprep.subr.bf16.mxu0 0
        %310 = vmatpush2.bf16.msra.mxu0 0
        %311 = vmatprep.subr.bf16.mxu0 0
        %312 = vmatpush2.bf16.msra.mxu0 0
        %313 = vmatprep.subr.bf16.mxu0 0
        %314 = vmatpush2.bf16.msra.mxu0 0
        %315 = vmatprep.subr.bf16.mxu0 0
        %316 = vmatpush2.bf16.msra.mxu0 0
        %317 = vmatprep.subr.bf16.mxu0 0
        %318 = vmatpush2.bf16.msra.mxu0 0
        %319 = vmatprep.mubr.bf16.mxu0 0
        %320 = vmatmul.mubr.bf16.gmra.mxu0 %v222
        %v321 = vpop.f32.mrf.mxu0
        %v322 = vadd.f32 0.0, %v321
        %v323 = vpop.f32.mrf.mxu0
        %v324 = vpop.f32.mrf.mxu0
        %v325 = vadd.f32 0.0, %v324
        %v326 = vpop.f32.mrf.mxu0
        %327 = vdwg.mxu0
        %v328 = vmax.f32 %v322, 0.0
        %v329 = vmax.f32 %v325, 0.0
        %v332 = vcombine.high %v328, %v328
        %v334 = vunpack.c.l.s4 1983009808
        %v335 = vunpack.c.0.s8 %v334
        %v336 = vlaneseq
        %v337 = vshrl.u32 %v336, 7
        %v338 = vsub.s32 %v335, %v337
        %v339 = vrot.slane %v328, %v338
        %v341 = vunpack.c.l.s4 1983009808
        %v342 = vunpack.c.0.s8 %v341
        %v343 = vlaneseq
        %v344 = vshrl.u32 %v343, 7
        %v345 = vsub.s32 %v342, %v344
        %v346 = vrot.slane %v332, %v345
        %v347 = vcombine.high %v339, %v339
        %v348 = vcombine.high %v346, %v346
        %v349 = vcombine.high %v329, %v329
        %v351 = vunpack.c.l.s4 1983009808
        %v352 = vunpack.c.0.s8 %v351
        %v353 = vlaneseq
        %v354 = vshrl.u32 %v353, 7
        %v355 = vsub.s32 %v352, %v354
        %v356 = vrot.slane %v329, %v355
        %v358 = vunpack.c.l.s4 1983009808
        %v359 = vunpack.c.0.s8 %v358
        %v360 = vlaneseq
        %v361 = vshrl.u32 %v360, 7
        %v362 = vsub.s32 %v359, %v361
        %v363 = vrot.slane %v349, %v362
        %v364 = vcombine.high %v356, %v356
        %v365 = vcombine.high %v363, %v363
        %vm374 = vcmask 1041408
        %v375 = vsel %vm374, %v339, 0.0
        %v376 = vrot.slane %v375, 4
        %v377 = vadd.f32 %v375, %v376
        %v378 = vrot.slane %v377, 2
        %v379 = vadd.f32 %v377, %v378
        %v380 = vrot.slane %v379, 1
        %v381 = vadd.f32 %v379, %v380
        %v382 = vsel %vm374, %v347, 0.0
        %v383 = vrot.slane %v382, 4
        %v384 = vadd.f32 %v382, %v383
        %v385 = vrot.slane %v384, 2
        %v386 = vadd.f32 %v384, %v385
        %v387 = vrot.slane %v386, 1
        %v388 = vadd.f32 %v386, %v387
        %v389 = vsel %vm374, %v346, 0.0
        %v390 = vrot.slane %v389, 4
        %v391 = vadd.f32 %v389, %v390
        %v392 = vrot.slane %v391, 2
        %v393 = vadd.f32 %v391, %v392
        %v394 = vrot.slane %v393, 1
        %v395 = vadd.f32 %v393, %v394
        %v396 = vsel %vm374, %v348, 0.0
        %v397 = vrot.slane %v396, 4
        %v398 = vadd.f32 %v396, %v397
        %v399 = vrot.slane %v398, 2
        %v400 = vadd.f32 %v398, %v399
        %v401 = vrot.slane %v400, 1
        %v402 = vadd.f32 %v400, %v401
        %v403 = vsel %vm374, %v356, 0.0
        %v404 = vrot.slane %v403, 4
        %v405 = vadd.f32 %v403, %v404
        %v406 = vrot.slane %v405, 2
        %v407 = vadd.f32 %v405, %v406
        %v408 = vrot.slane %v407, 1
        %v409 = vadd.f32 %v407, %v408
        %v410 = vsel %vm374, %v364, 0.0
        %v411 = vrot.slane %v410, 4
        %v412 = vadd.f32 %v410, %v411
        %v413 = vrot.slane %v412, 2
        %v414 = vadd.f32 %v412, %v413
        %v415 = vrot.slane %v414, 1
        %v416 = vadd.f32 %v414, %v415
        %v417 = vsel %vm374, %v363, 0.0
        %v418 = vrot.slane %v417, 4
        %v419 = vadd.f32 %v417, %v418
        %v420 = vrot.slane %v419, 2
        %v421 = vadd.f32 %v419, %v420
        %v422 = vrot.slane %v421, 1
        %v423 = vadd.f32 %v421, %v422
        %v424 = vsel %vm374, %v365, 0.0
        %v425 = vrot.slane %v424, 4
        %v426 = vadd.f32 %v424, %v425
        %v427 = vrot.slane %v426, 2
        %v428 = vadd.f32 %v426, %v427
        %v429 = vrot.slane %v428, 1
        %v430 = vadd.f32 %v428, %v429
        %v431 = vpack.c.bf16 %v381, %v381
        %v432 = vpack.c.bf16 %v388, %v388
        %v433 = vpack.c.bf16 %v395, %v395
        %v434 = vpack.c.bf16 %v402, %v402
        %v435 = vpack.c.bf16 %v409, %v409
        %v436 = vpack.c.bf16 %v416, %v416
        %v437 = vpack.c.bf16 %v423, %v423
        %v438 = vpack.c.bf16 %v430, %v430
        %v439 = vld [vmem:[#allocation7] sm:$0xf]
        %v440 = vld [vmem:[#allocation7 + $0x4] sm:$0xf]
        %v441 = vld [vmem:[#allocation7 + $0x8] sm:$0xf]
        %v442 = vld [vmem:[#allocation7 + $0xc] sm:$0xf]
        %v443 = vld [vmem:[#allocation7 + $0x10] sm:$0xf]
        %v444 = vld [vmem:[#allocation7 + $0x14] sm:$0xf]
        %v445 = vld [vmem:[#allocation7 + $0x18] sm:$0xf]
        %v446 = vld [vmem:[#allocation7 + $0x1c] sm:$0xf]
        %v447 = vld [vmem:[#allocation7 + $0x20] sm:$0xf]
        %v448 = vld [vmem:[#allocation7 + $0x24] sm:$0xf]
        %v449 = vld [vmem:[#allocation7 + $0x28] sm:$0xf]
        %v450 = vld [vmem:[#allocation7 + $0x2c] sm:$0xf]
        %v451 = vld [vmem:[#allocation7 + $0x30] sm:$0xf]
        %v452 = vld [vmem:[#allocation7 + $0x34] sm:$0xf]
        %v453 = vld [vmem:[#allocation7 + $0x38] sm:$0xf]
        %v454 = vld [vmem:[#allocation7 + $0x3c] sm:$0xf]
        %v463 = vunpack.c.l.b16 %v431
        %v464 = vunpack.c.l.b16 %v432
        %v465 = vunpack.c.l.b16 %v433
        %v466 = vunpack.c.l.b16 %v434
        %v467 = vunpack.c.l.b16 %v435
        %v468 = vunpack.c.l.b16 %v436
        %v469 = vunpack.c.l.b16 %v437
        %v470 = vunpack.c.l.b16 %v438
        %vm471 = vcmask 1041409
        %v472 = vsel %vm471, %v464, %v463
        %vm473 = vcmask 1042434
        %v474 = vsel %vm473, %v465, %v472
        %vm475 = vcmask 1043459
        %v476 = vsel %vm475, %v466, %v474
        %vm477 = vcmask 1044484
        %v478 = vsel %vm477, %v467, %v476
        %vm479 = vcmask 1045509
        %v480 = vsel %vm479, %v468, %v478
        %vm481 = vcmask 1046534
        %v482 = vsel %vm481, %v469, %v480
        %vm483 = vcmask 1047559
        %v484 = vsel %vm483, %v470, %v482
        %v485 = vpack.c.b16 %v484, %v484
        %v503 = vunpack.c.l.b16 %v439
        %v504 = vunpack.c.l.b16 %v440
        %v505 = vunpack.c.l.b16 %v441
        %v506 = vunpack.c.l.b16 %v442
        %v507 = vunpack.c.l.b16 %v443
        %v508 = vunpack.c.l.b16 %v444
        %v509 = vunpack.c.l.b16 %v445
        %v510 = vunpack.c.l.b16 %v446
        %v511 = vunpack.c.l.b16 %v447
        %v512 = vunpack.c.l.b16 %v448
        %v513 = vunpack.c.l.b16 %v449
        %v514 = vunpack.c.l.b16 %v450
        %v515 = vunpack.c.l.b16 %v451
        %v516 = vunpack.c.l.b16 %v452
        %v517 = vunpack.c.l.b16 %v453
        %v518 = vunpack.c.l.b16 %v454
        %v519 = vpack.c.b16 %v504, %v503
        %v520 = vpack.c.b16 %v506, %v505
        %v521 = vpack.c.b16 %v508, %v507
        %v522 = vpack.c.b16 %v510, %v509
        %v523 = vpack.c.b16 %v512, %v511
        %v524 = vpack.c.b16 %v514, %v513
        %v525 = vpack.c.b16 %v516, %v515
        %v526 = vpack.c.b16 %v518, %v517
        %535 = vmatprep.subr.bf16.mxu0 0
        %536 = vmatpush1.bf16.msra.mxu0 %v526
        %537 = vmatprep.subr.bf16.mxu0 0
        %538 = vmatpush1.bf16.msra.mxu0 %v525
        %539 = vmatprep.subr.bf16.mxu0 0
        %540 = vmatpush1.bf16.msra.mxu0 %v524
        %541 = vmatprep.subr.bf16.mxu0 0
        %542 = vmatpush1.bf16.msra.mxu0 %v523
        %543 = vmatprep.subr.bf16.mxu0 0
        %544 = vmatpush1.bf16.msra.mxu0 %v522
        %545 = vmatprep.subr.bf16.mxu0 0
        %546 = vmatpush1.bf16.msra.mxu0 %v521
        %547 = vmatprep.subr.bf16.mxu0 0
        %548 = vmatpush1.bf16.msra.mxu0 %v520
        %549 = vmatprep.subr.bf16.mxu0 0
        %550 = vmatpush1.bf16.msra.mxu0 %v519
        %551 = vmatprep.subr.bf16.mxu0 0
        %552 = vmatpush2.bf16.msra.mxu0 0
        %553 = vmatprep.subr.bf16.mxu0 0
        %554 = vmatpush2.bf16.msra.mxu0 0
        %555 = vmatprep.subr.bf16.mxu0 0
        %556 = vmatpush2.bf16.msra.mxu0 0
        %557 = vmatprep.subr.bf16.mxu0 0
        %558 = vmatpush2.bf16.msra.mxu0 0
        %559 = vmatprep.subr.bf16.mxu0 0
        %560 = vmatpush2.bf16.msra.mxu0 0
        %561 = vmatprep.subr.bf16.mxu0 0
        %562 = vmatpush2.bf16.msra.mxu0 0
        %563 = vmatprep.subr.bf16.mxu0 0
        %564 = vmatpush2.bf16.msra.mxu0 0
        %565 = vmatprep.subr.bf16.mxu0 0
        %566 = vmatpush2.bf16.msra.mxu0 0
        %567 = vmatprep.mubr.bf16.mxu0 0
        %568 = vmatmul.mubr.bf16.gmra.mxu0 %v485
        %v569 = vpop.f32.mrf.mxu0
        %v570 = vadd.f32 0.0, %v569
        %v571 = vpop.f32.mrf.mxu0
        %v572 = vpop.f32.mrf.mxu0
        %v573 = vpop.f32.mrf.mxu0
        %574 = vdwg.mxu0
        %575 = vst [vmem:[%s217] sm:$0xff] %v570
        %s576 = sand.u32 %s97, 1
        %s577 = scalar_lea.sflag [#allocation4], %s576
        %s578 = sand.u32 %s97, 1
        %s579 = smul.addr %s578, 8
        %s580 = scalar_lea.vmem [#allocation8], %s579
        // Predicated region
        $region45: #{tpu_custom_call.1} parent=31 // pred_check
          %p581 = pneg %p107
        $region46: #{tpu_custom_call.1} parent=31 // pred_check_branch
          %583 = sbr.rel (%p581) target = $region48
        $region47: #{tpu_custom_call.1} parent=31 // pred_region
          %s585 = ssub.s32 128, 128
          %586 = vsyncadd %s577, %s585
          %s587 = smul.addr %s21, 128
          %s588 = scalar_lea.hbm %s3, %s587
          %s590 = sshll.u32 %s580, 4
          %s591 = int_to_ptr.vmem [resolvable:$true] %s590
          %593 = dma.vmem_to_hbm [thread:$0]  %s591, 128, %s588, %s577
        $region48: #{tpu_custom_call.1} parent=31 // pred_fallthru
          _
      $region32: #{tpu_custom_call.1} parent=5 // pred_fallthru
        _
      %p594 = scmp.le.s32.totalorder 2, %s16
      // Predicated region
      $region49: #{tpu_custom_call.1} parent=5 // pred_check
        %p595 = pneg %p594
      $region50: #{tpu_custom_call.1} parent=5 // pred_check_branch
        %597 = sbr.rel (%p595) target = $region52
      $region51: #{tpu_custom_call.1} parent=5 // pred_region
        %s598 = ssub.s32 %s16, 2
        // Predicated region
        $region53: #{tpu_custom_call.1} parent=51 // pred_check
          %p599 = pneg %p113
        $region54: #{tpu_custom_call.1} parent=51 // pred_check_branch
          %601 = sbr.rel (%p599) target = $region56
        $region55: #{tpu_custom_call.1} parent=51 // pred_region
          %s602 = sand.u32 %s98, 1
          %s603 = scalar_lea.sflag [#allocation4], %s602
          %s604 = sand.u32 %s98, 1
          %s605 = smul.addr %s604, 8
          %s606 = scalar_lea.vmem [#allocation8], %s605
          %607 = dma.done %s603, 128
        $region56: #{tpu_custom_call.1} parent=51 // pred_fallthru
          _
      $region52: #{tpu_custom_call.1} parent=5 // pred_fallthru
        _
    $region6: #{tpu_custom_call.1} parent=1 // loop_footer
      %s20 = sadd.s32 1, %s16
    $region7: #{tpu_custom_call.1} parent=1 // loop_footer_branch
      %15 = sbr.rel target = $region3
    $region8: #{tpu_custom_call.1} parent=1 // loop_exit
      _
    %608 = vsyncpa [#allocation3], 1
    %s609 = scalar_lea.sflag [#allocation3], 1
    %610 = vsyncpa %s609, 1
    %611 = vsyncpa [#allocation6], 1
    %612 = vsyncpa [#allocation4], 1
    %s613 = scalar_lea.sflag [#allocation4], 1
    %614 = vsyncpa %s613, 1

</llo_original>
